<compile_context>
chip_gen: v7x
topology: tpu7x:2x2x1
jax: 0.10.0
libtpu: 0.0.40
codegen_flags: <defaults>
</compile_context>

<pallas_src>
import math

import jax
import jax.numpy as jnp
from jax.experimental import pallas as pl
from jax.experimental.pallas import tpu as pltpu


def _add_kernel(a_ref, b_ref, o_ref):
    # One VMEM tile: pure VPU elementwise add.
    o_ref[...] = a_ref[...] + b_ref[...]


def _sublane_multiple(dtype) -> int:
    # Sub-32-bit dtypes pack along sublanes.
    itemsize = jnp.dtype(dtype).itemsize
    return {4: 8, 2: 16, 1: 32}.get(itemsize, 8)


def _tensorcores_per_chip() -> int:
    # v7x has 2 TensorCores per chip; v5e/v6e have 1.  Conservative fallback
    # (1) if detection fails, which only disables the megacore split.
    try:
        kind = getattr(jax.devices()[0], "device_kind", "") or ""
        if "v7" in kind.lower():
            return 2
    except Exception:
        pass
    return 1


def pallas_add(x303, x293, *, target_block_bytes=2 * 1024 * 1024):
    """Computes x303 + x293 (PyTorch: operator.add) via a Pallas TPU kernel."""
    assert x303.shape == x293.shape and x303.dtype == x293.dtype
    orig_shape = x303.shape
    dtype = x303.dtype
    itemsize = jnp.dtype(dtype).itemsize

    lanes = 128
    sub = _sublane_multiple(dtype)

    total = math.prod(orig_shape) if orig_shape else 1
    if total == 0:
        # Zero-element edge case: nothing to compute; avoid a (0,128) BlockSpec.
        return jnp.zeros(orig_shape, dtype)

    a_flat = jnp.ravel(x303)
    b_flat = jnp.ravel(x293)

    # Padding is only needed to reach a multiple of 128 lanes (the sublane
    # constraint lives on the BlockSpec and ragged last row-blocks are masked
    # by Pallas).  For the production shape [1,768,14,14] f32 and the test
    # shapes below, pad == 0 so no extra HBM copies are materialized.
    # TODO(synk): for totals not divisible by 128, handle the tail in-kernel
    # (masked store on the final block) instead of host-side pad + slice.
    pad = (-total) % lanes
    if pad:
        a_flat = jnp.pad(a_flat, (0, pad))
        b_flat = jnp.pad(b_flat, (0, pad))
    padded = total + pad
    rows = padded // lanes

    a2 = a_flat.reshape(rows, lanes)
    b2 = b_flat.reshape(rows, lanes)

    slab_bytes = rows * lanes * itemsize
    num_cores = _tensorcores_per_chip()

    # Block sizing: cap at ~target_block_bytes per input buffer.
    max_rows = max(sub, (target_block_bytes // (lanes * itemsize)) // sub * sub)

    if rows > max_rows:
        # Large slab: multiple grid steps; "parallel" axis shards them across
        # TCs on v7x automatically.
        tile_rows = max_rows
    elif num_cores >= 2 and slab_bytes >= (1 << 20) and rows >= 2 * sub:
        # v7x only: split one resident slab into 2 steps so both TensorCores
        # get work — but only when each half's DMA time exceeds the extra
        # ~0.35 us per-step overhead.
        half = pl.cdiv(rows, 2)
        tile_rows = ((half + sub - 1) // sub) * sub
    else:
        # Single-TC chips (v5e/v6e) or small slabs: one block, one grid step.
        # tile_rows == rows is legal even when rows isn't a sublane multiple
        # (block equals the full array dim).
        tile_rows = rows

    grid = (pl.cdiv(rows, tile_rows),)
    spec = pl.BlockSpec((tile_rows, lanes), lambda i: (i, 0))

    block_bytes = tile_rows * lanes * itemsize
    # 3 arrays x 2 pipeline buffers x block + 2 MiB headroom; safe on v5e's
    # 16 MiB scoped default for the 2 MiB block budget, and explicit so a
    # raised budget doesn't silently overshoot (cap well under v7x 64 MiB).
    vmem_limit = min(3 * 2 * block_bytes + (2 << 20), 48 << 20)

    out2 = pl.pallas_call(
        _add_kernel,
        out_shape=jax.ShapeDtypeStruct((rows, lanes), dtype),
        grid_spec=pltpu.PrefetchScalarGridSpec(
            num_scalar_prefetch=0,
            grid=grid,
            in_specs=[spec, spec],
            out_specs=spec,
        ),
        compiler_params=pltpu.CompilerParams(
            dimension_semantics=("parallel",),
            vmem_limit_bytes=vmem_limit,
        ),
        cost_estimate=pl.CostEstimate(
            flops=total,
            transcendentals=0,
            bytes_accessed=3 * total * itemsize,
        ),
    )(a2, b2)

    out_flat = out2.reshape(-1)
    if pad:
        out_flat = out_flat[:total]
    return out_flat.reshape(orig_shape)


if __name__ == "__main__":
    key = jax.random.PRNGKey(0)
    k1, k2, k3, k4, k5, k6 = jax.random.split(key, 6)

    # Small NCHW test shape consistent with the module (residual add).
    shape_small = (2, 4, 16, 16)  # 2048 elems -> (16, 128) slab, grid=(1,)
    a_s = jax.random.normal(k1, shape_small, dtype=jnp.float32)
    b_s = jax.random.normal(k2, shape_small, dtype=jnp.float32)
    out_s = jax.block_until_ready(pallas_add(a_s, b_s))
    assert out_s.shape == shape_small
    assert jnp.allclose(out_s, a_s + b_s, atol=1e-6), "mismatch (small shape)"

    # Production shape from the module: (1176, 128) slab, single grid step on
    # v5e/v6e (and on v7x, since the slab is < 1 MiB per input).
    shape_prod = (1, 768, 14, 14)  # 150528 elems
    a_p = jax.random.normal(k3, shape_prod, dtype=jnp.float32)
    b_p = jax.random.normal(k4, shape_prod, dtype=jnp.float32)
    out_p = jax.block_until_ready(pallas_add(a_p, b_p))
    assert out_p.shape == shape_prod
    assert jnp.allclose(out_p, a_p + b_p, atol=1e-6), "mismatch (prod shape)"

    # Odd-sized shape: exercises the (rare) pad-to-128 fallback and a block
    # whose row count is not a sublane multiple (legal: block == full array).
    shape_odd = (3, 5, 7, 11)  # 1155 elems -> pad 125 -> (10, 128) slab
    a_o = jax.random.normal(k5, shape_odd, dtype=jnp.float32)
    b_o = jax.random.normal(k6, shape_odd, dtype=jnp.float32)
    out_o = jax.block_until_ready(pallas_add(a_o, b_o))
    assert out_o.shape == shape_odd
    assert jnp.allclose(out_o, a_o + b_o, atol=1e-6), "mismatch (odd shape)"

    print("KERNEL_OK")
</pallas_src>

<mosaic_0001>
module attributes {stable_mosaic.version = 11 : i64} {
  func.func @_add_kernel(%arg0: i32, %arg1: memref<16x128xf32, #tpu.memory_space<vmem>>, %arg2: memref<16x128xf32, #tpu.memory_space<vmem>>, %arg3: memref<16x128xf32, #tpu.memory_space<vmem>>) attributes {dimension_semantics = [#tpu.dimension_semantics<parallel>], iteration_bounds = array<i64: 1>, scalar_prefetch = 0 : i64, scratch_operands = 0 : i64, tpu.core_type = #tpu.core_type<tc>, window_params = [{transform_indices = @transform_0, window_bounds = array<i64: 16, 128>}, {transform_indices = @transform_1, window_bounds = array<i64: 16, 128>}, {transform_indices = @transform_2, window_bounds = array<i64: 16, 128>}]} {
    %c0 = arith.constant 0 : index
    %c0_0 = arith.constant 0 : index
    %0 = vector.load %arg1[%c0, %c0_0] : memref<16x128xf32, #tpu.memory_space<vmem>>, vector<16x128xf32>
    %c0_1 = arith.constant 0 : index
    %c0_2 = arith.constant 0 : index
    %1 = vector.load %arg2[%c0_1, %c0_2] : memref<16x128xf32, #tpu.memory_space<vmem>>, vector<16x128xf32>
    %2 = arith.addf %0, %1 : vector<16x128xf32>
    %c0_3 = arith.constant 0 : index
    %c0_4 = arith.constant 0 : index
    %3 = vector.load %arg3[%c0_3, %c0_4] : memref<16x128xf32, #tpu.memory_space<vmem>>, vector<16x128xf32>
    tpu.vector_store %arg3[%c0_3, %c0_4], %2 {strides = array<i32>} : memref<16x128xf32, #tpu.memory_space<vmem>>, vector<16x128xf32>,
    return
  }
  func.func @transform_0(%arg0: i32) -> (i32, i32) {
    %c0_i32 = arith.constant 0 : i32
    %c0_i32_0 = arith.constant 0 : i32
    return %arg0, %c0_i32 : i32, i32
  }
  func.func @transform_1(%arg0: i32) -> (i32, i32) {
    %c0_i32 = arith.constant 0 : i32
    %c0_i32_0 = arith.constant 0 : i32
    return %arg0, %c0_i32 : i32, i32
  }
  func.func @transform_2(%arg0: i32) -> (i32, i32) {
    %c0_i32 = arith.constant 0 : i32
    %c0_i32_0 = arith.constant 0 : i32
    return %arg0, %c0_i32 : i32, i32
  }
}

</mosaic_0001>

<llo_original>
// kernel: tpu_custom_call.1
$region0: #{tpu_custom_call.1}
  #allocation0 [shape = 'u32[]', space=smem, size = 0x4, offset = 0x4, fixed_abs, tag = 'smem constant byte address 0x4 - core index']
  #allocation1 [shape = 'u32[144,128]{1,0:T(1,128)}', space=vmem, size = 0x12000, scoped, tag = 'internal scratch']
  %s0 = inlined_call_operand.hbm [shape: f32[16,128], index: 0, kind: input, shape index: {}]
  %s1 = inlined_call_operand.hbm [shape: f32[16,128], index: 1, kind: input, shape index: {}]
  %s2 = inlined_call_operand.hbm [shape: f32[16,128], index: 2, kind: output, shape index: {}]
  %s3 = sld [smem:[#allocation0]]
  $region26: #{tpu_custom_call.1} parent=0
    _
  %s5 = ssub.s32 1, %s3
  %s6 = scalar_select 0, %s5, %s3
  $region1: #{tpu_custom_call.1} parent=0
    #allocation2 [shape = 'u8[8192]{0}', space=vmem, size = 0x2000, scoped, tag = 'input window, operand 0, single buffered']
    #allocation3 [shape = 's32[1]{0}', space=sflag, size = 0x4, scoped, tag = 'scoped memory for tpu_custom_call.1']
    #allocation4 [shape = 's32[1]{0}', space=sflag, size = 0x4, scoped, tag = 'scoped memory for tpu_custom_call.1']
    #allocation5 [shape = 'u8[8192]{0}', space=vmem, size = 0x2000, scoped, tag = 'input window, operand 1, single buffered']
    #allocation6 [shape = 's32[1]{0}', space=sflag, size = 0x4, scoped, tag = 'scoped memory for tpu_custom_call.1']
    #allocation7 [shape = 'u8[8192]{0}', space=vmem, size = 0x2000, scoped, tag = 'output window, operand 0, single buffered']
    %7 = vsyncpa [#allocation3], 0
    %8 = vsyncpa [#allocation6], 0
    %9 = vsyncpa [#allocation4], 0
    // Predicated region
    $region2: #{tpu_custom_call.1} parent=1 // pred_check
      _
    $region3: #{tpu_custom_call.1} parent=1 // pred_check_branch
      %11 = sbr.rel (0) target = $region5
    $region4: #{tpu_custom_call.1} parent=1 // pred_region
      %s13 = ssub.s32 256, 256
      %14 = vsyncadd [#allocation3], %s13
      %s15 = sshll.u32 [#allocation2], 4
      %s16 = int_to_ptr.vmem [resolvable:$true] %s15
      %21 = dma.hbm_to_vmem [thread:$0]  %s0, 256, %s16, [#allocation3], 128, 128, 8
    $region5: #{tpu_custom_call.1} parent=1 // pred_fallthru
      _
    // Predicated region
    $region6: #{tpu_custom_call.1} parent=1 // pred_check
      _
    $region7: #{tpu_custom_call.1} parent=1 // pred_check_branch
      %23 = sbr.rel (0) target = $region9
    $region8: #{tpu_custom_call.1} parent=1 // pred_region
      %s25 = ssub.s32 256, 256
      %26 = vsyncadd [#allocation6], %s25
      %s27 = sshll.u32 [#allocation5], 4
      %s28 = int_to_ptr.vmem [resolvable:$true] %s27
      %33 = dma.hbm_to_vmem [thread:$0]  %s1, 256, %s28, [#allocation6], 128, 128, 8
    $region9: #{tpu_custom_call.1} parent=1 // pred_fallthru
      _
    // Predicated region
    $region10: #{tpu_custom_call.1} parent=1 // pred_check
      _
    $region11: #{tpu_custom_call.1} parent=1 // pred_check_branch
      %35 = sbr.rel (0) target = $region13
    $region12: #{tpu_custom_call.1} parent=1 // pred_region
      %36 = dma.done [#allocation3], 256
    $region13: #{tpu_custom_call.1} parent=1 // pred_fallthru
      _
    // Predicated region
    $region14: #{tpu_custom_call.1} parent=1 // pred_check
      _
    $region15: #{tpu_custom_call.1} parent=1 // pred_check_branch
      %38 = sbr.rel (0) target = $region17
    $region16: #{tpu_custom_call.1} parent=1 // pred_region
      %39 = dma.done [#allocation6], 256
    $region17: #{tpu_custom_call.1} parent=1 // pred_fallthru
      _
    %v40 = vld [vmem:[#allocation2] sm:$0xff]
    %v41 = vld [vmem:[#allocation2 + $0x8] sm:$0xff]
    %v42 = vld [vmem:[#allocation5] sm:$0xff]
    %v43 = vld [vmem:[#allocation5 + $0x8] sm:$0xff]
    %v44 = vadd.f32 %v40, %v42
    %v45 = vadd.f32 %v41, %v43
    %46 = vst [vmem:[#allocation7] sm:$0xff] %v44
    %47 = vst [vmem:[#allocation7 + $0x8] sm:$0xff] %v45
    // Predicated region
    $region18: #{tpu_custom_call.1} parent=1 // pred_check
      _
    $region19: #{tpu_custom_call.1} parent=1 // pred_check_branch
      %49 = sbr.rel (0) target = $region21
    $region20: #{tpu_custom_call.1} parent=1 // pred_region
      %s51 = ssub.s32 256, 256
      %52 = vsyncadd [#allocation4], %s51
      %s53 = sshll.u32 [#allocation7], 4
      %s54 = int_to_ptr.vmem [resolvable:$true] %s53
      %59 = dma.vmem_to_hbm [thread:$0]  %s54, 256, %s2, [#allocation4], 128, 128, 8
    $region21: #{tpu_custom_call.1} parent=1 // pred_fallthru
      _
    // Predicated region
    $region22: #{tpu_custom_call.1} parent=1 // pred_check
      _
    $region23: #{tpu_custom_call.1} parent=1 // pred_check_branch
      %61 = sbr.rel (0) target = $region25
    $region24: #{tpu_custom_call.1} parent=1 // pred_region
      %62 = dma.done [#allocation4], 256
    $region25: #{tpu_custom_call.1} parent=1 // pred_fallthru
      _
    %63 = vsyncpa [#allocation3], 1
    %64 = vsyncpa [#allocation6], 1
    %65 = vsyncpa [#allocation4], 1

</llo_original>
